<compile_context>
chip_gen: v7x
topology: tpu7x:2x2x1
jax: 0.10.0
libtpu: 0.0.40
codegen_flags: <defaults>
</compile_context>

<pallas_src>
import functools

import jax
import jax.numpy as jnp
from jax.experimental import pallas as pl
from jax.experimental.pallas import tpu as pltpu


# ---------------------------------------------------------------------------
# Small helpers
# ---------------------------------------------------------------------------
def _round_up(x, m):
    return ((x + m - 1) // m) * m


def _cdiv(a, b):
    return -(-a // b)


def _vmem_limit_bytes():
    """~3/4 of physical VMEM (128 MiB on v5e/v6e, 64 MiB on v7x)."""
    cap = 64 << 20
    try:
        cap = int(pltpu.get_tpu_info().vmem_capacity_bytes)
    except Exception:
        pass
    return min((cap * 3) // 4, 96 << 20)


def _mxu_dot(a, b):
    """bf16 MXU matmul with f32 accumulation (used in kernels and reference)."""
    return jnp.dot(a.astype(jnp.bfloat16), b.astype(jnp.bfloat16),
                   preferred_element_type=jnp.float32)


def _choose_tq(n, b, k_pad):
    """Query-tile size: target ~512 rows of (TQ*K, H) working set, >=2 steps."""
    tq = max(8, min(128, (512 // max(k_pad, 1)) // 8 * 8))
    tq = min(tq, _round_up(n, 8))
    # v7x has 2 TensorCores: keep at least 2 grid steps so both get work.
    while b * _cdiv(n, tq) < 2 and tq > 8:
        tq = max(8, (tq // 2 // 8) * 8)
    return tq


def _knn_indices(points, k):
    # squared pairwise distances via ||x||^2 - 2 x.y + ||y||^2 (MXU-friendly,
    # no (B,N,N,3) broadcast).  Note: this expansion can differ from an exact
    # cdist for tightly clustered points (tie-breaking); it matches the JAX
    # reference below.
    sq = jnp.sum(points * points, axis=-1)                           # (B, N)
    d2 = (sq[:, :, None]
          - 2.0 * jnp.einsum("bnd,bmd->bnm", points, points)
          + sq[:, None, :])
    _, idx = jax.lax.top_k(-d2, k)                                   # (B, N, K)
    return idx


# ---------------------------------------------------------------------------
# Kernels
# ---------------------------------------------------------------------------
def _linear_kernel(x_ref, w_ref, b_ref, o_ref):
    # o = x @ W + b         x:(TM,Cin) bf16   W:(Cin,Cout) bf16   b:(1,Cout) f32
    o_ref[...] = (_mxu_dot(x_ref[...], w_ref[...]) + b_ref[...]).astype(o_ref.dtype)


def _pt_attention_kernel(k_real,
                         f_ref, g_ref, res_ref,
                         wp1_ref, bp1_ref, wp2_ref, bp2_ref,
                         wk_ref, bk_ref, wq_ref, bq_ref, wv_ref, bv_ref,
                         wa1_ref, ba1_ref, wa2_ref, ba2_ref,
                         we_ref, be_ref,
                         o_ref):
    # One grid step handles TQ query points x Kp (padded) neighbors.
    # g_ref holds the concatenated [grouped_feats | point-delta] stream, so the
    # position-encoding / q / v projections are plain (R, H+3) x (H+3, H) dots
    # with zero-padded weight rows — no coordinate stream, no lane-3 padding.
    TQ, Kp, Hp3 = g_ref.shape
    H = f_ref.shape[-1]
    R = TQ * Kp

    x = g_ref[...].reshape(R, Hp3)                                   # bf16

    # ---- position encoding: Conv2d(3,H,1) -> ReLU -> Conv2d(H,H,1) ----------
    h1 = jnp.maximum(_mxu_dot(x, wp1_ref[...]) + bp1_ref[...], 0.0)
    delta = _mxu_dot(h1, wp2_ref[...]) + bp2_ref[...]                # (R, H) f32

    # ---- q / v on grouped stream, k on central features ----------------------
    q = _mxu_dot(x, wq_ref[...]) + bq_ref[...]                       # (R, H)
    v = _mxu_dot(x, wv_ref[...]) + bv_ref[...] + delta               # (R, H)

    k = _mxu_dot(f_ref[...], wk_ref[...]) + bk_ref[...]              # (TQ, H)
    k_b = jnp.broadcast_to(k[:, None, :], (TQ, Kp, H)).reshape(R, H)

    # ---- attention encoding: Conv2d -> ReLU -> Conv2d on (k - q + delta) -----
    a1 = jnp.maximum(_mxu_dot(k_b - q + delta, wa1_ref[...]) + ba1_ref[...], 0.0)
    scores = (_mxu_dot(a1, wa2_ref[...]) + ba2_ref[...]).reshape(TQ, Kp, H)

    if k_real != Kp:                       # static: mask padded neighbors
        nbr = jax.lax.broadcasted_iota(jnp.int32, (TQ, Kp, H), 1)
        scores = jnp.where(nbr < k_real, scores, -jnp.inf)

    # ---- softmax over the K neighbors (PyTorch dim=3), weighted sum over K ---
    m = jnp.max(scores, axis=1, keepdims=True)
    e = jnp.exp(scores - m)
    att = e * pl.reciprocal(jnp.sum(e, axis=1, keepdims=True), approx=True)
    attn_out = jnp.sum(att * v.reshape(TQ, Kp, H), axis=1)           # (TQ, H)

    # ---- fused e_layer (Conv1d H->Cout) + residual ---------------------------
    o_ref[...] = (_mxu_dot(attn_out, we_ref[...]) + be_ref[...]
                  + res_ref[...]).astype(o_ref.dtype)


# ---------------------------------------------------------------------------
# Wrapper
# ---------------------------------------------------------------------------
def point_transformer_block(feats, points, params, num_neighbors):
    B, N, Cin = feats.shape
    H = params["wr"].shape[1]
    Cout = params["we"].shape[1]
    K = num_neighbors
    assert Cin == Cout, "residual add requires input_dim == output_dim"

    f32, bf16 = jnp.float32, jnp.bfloat16
    vmem_limit = _vmem_limit_bytes()

    # ---- r_layer: Conv1d(input_dim, hidden_dim, 1) on collapsed, padded rows -
    M = B * N
    TM = min(512, _round_up(M, 8))
    M_pad = _round_up(M, TM)
    x2d = feats.reshape(M, Cin)
    if M_pad != M:
        x2d = jnp.pad(x2d, ((0, M_pad - M), (0, 0)))
    feats_h = pl.pallas_call(
        _linear_kernel,
        out_shape=jax.ShapeDtypeStruct((M_pad, H), f32),
        grid=(M_pad // TM,),
        in_specs=[pl.BlockSpec((TM, Cin), lambda i: (i, 0)),
                  pl.BlockSpec((Cin, H), lambda i: (0, 0)),
                  pl.BlockSpec((1, H), lambda i: (0, 0))],
        out_specs=pl.BlockSpec((TM, H), lambda i: (i, 0)),
        compiler_params=pltpu.CompilerParams(
            dimension_semantics=("parallel",),
            vmem_limit_bytes=vmem_limit),
    )(x2d.astype(bf16), params["wr"].astype(bf16), params["br"])
    feats_h = feats_h[:M].reshape(B, N, H)

    # ---- kNN + group_gather (data-dependent -> XLA glue), bf16 stream --------
    idx = _knn_indices(points, K)
    gather = jax.vmap(lambda x, i: x[i])
    gf = gather(feats_h, idx)                                        # (B,N,K,H)
    pd = points[:, :, None, :] - gather(points, idx)                 # (B,N,K,3)
    grouped = jnp.concatenate([gf, pd], axis=-1).astype(bf16)        # (B,N,K,H+3)

    # pad K to a multiple of 8 so in-kernel (TQ,K,*)<->(TQ*K,*) reshapes are free
    K8 = _round_up(K, 8)
    if K8 != K:
        grouped = jnp.pad(grouped, ((0, 0), (0, 0), (0, K8 - K), (0, 0)))

    # zero-padded projection weights so the concatenated [gf | pd] stream feeds
    # position-encoding (pd rows) and q/v (gf rows) without any in-kernel slicing
    wp1z = jnp.concatenate([jnp.zeros((H, H), f32), params["wp1"]], axis=0)
    wqz = jnp.concatenate([params["wq"], jnp.zeros((3, H), f32)], axis=0)
    wvz = jnp.concatenate([params["wv"], jnp.zeros((3, H), f32)], axis=0)

    # ---- tile / pad along N ---------------------------------------------------
    TQ = _choose_tq(N, B, K8)
    N_pad = _round_up(N, TQ)
    NT = N_pad // TQ

    def padn(a):
        if N_pad == N:
            return a
        pad = [(0, 0)] * a.ndim
        pad[1] = (0, N_pad - N)
        return jnp.pad(a, pad)

    feats_h_b = padn(feats_h).astype(bf16)
    grouped_b = padn(grouped)
    resid = padn(feats)                                              # f32 residual

    wts = [
        wp1z.astype(bf16), params["bp1"],           # position_encoding layer 1
        params["wp2"].astype(bf16), params["bp2"],  # position_encoding layer 2
        params["wk"].astype(bf16), params["bk"],    # k_layer
        wqz.astype(bf16), params["bq"],             # q_layer (zero rows for pd)
        wvz.astype(bf16), params["bv"],             # v_layer (zero rows for pd)
        params["wa1"].astype(bf16), params["ba1"],  # attention_encoding layer 1
        params["wa2"].astype(bf16), params["ba2"],  # attention_encoding layer 2
        params["we"].astype(bf16), params["be"],    # e_layer (fused epilogue)
    ]

    def _wspec(a):
        nd = a.ndim
        return pl.BlockSpec(a.shape, lambda b, nq: (0,) * nd)

    out = pl.pallas_call(
        functools.partial(_pt_attention_kernel, K),
        out_shape=jax.ShapeDtypeStruct((B, N_pad, Cout), f32),
        grid=(B, NT),
        in_specs=[
            pl.BlockSpec((None, TQ, H), lambda b, nq: (b, nq, 0)),          # feats_h
            pl.BlockSpec((None, TQ, K8, H + 3), lambda b, nq: (b, nq, 0, 0)),  # [gf|pd]
            pl.BlockSpec((None, TQ, Cout), lambda b, nq: (b, nq, 0)),       # residual
        ] + [_wspec(w) for w in wts],
        out_specs=pl.BlockSpec((None, TQ, Cout), lambda b, nq: (b, nq, 0)),
        compiler_params=pltpu.CompilerParams(
            dimension_semantics=("parallel", "parallel"),
            vmem_limit_bytes=vmem_limit),
    )(feats_h_b, grouped_b, resid, *wts)

    return out[:, :N], points


# ---------------------------------------------------------------------------
# Pure-JAX reference (same bf16 matmul precision; exact softmax divide)
# ---------------------------------------------------------------------------
def reference_block(feats, points, params, num_neighbors):
    K = num_neighbors
    fh = _mxu_dot(feats, params["wr"]) + params["br"]
    idx = _knn_indices(points, K)
    gather = jax.vmap(lambda x, i: x[i])
    gf = gather(fh, idx)
    gp = gather(points, idx)
    pd = points[:, :, None, :] - gp
    delta = (_mxu_dot(jnp.maximum(_mxu_dot(pd, params["wp1"]) + params["bp1"], 0.0),
                      params["wp2"]) + params["bp2"])
    k = _mxu_dot(fh, params["wk"]) + params["bk"]
    q = _mxu_dot(gf, params["wq"]) + params["bq"]
    v = _mxu_dot(gf, params["wv"]) + params["bv"] + delta
    s = (_mxu_dot(jnp.maximum(_mxu_dot(k[:, :, None, :] - q + delta, params["wa1"])
                              + params["ba1"], 0.0),
                  params["wa2"]) + params["ba2"])
    att = jax.nn.softmax(s, axis=2)
    out = jnp.sum(att * v, axis=2)
    return _mxu_dot(out, params["we"]) + params["be"] + feats


# ---------------------------------------------------------------------------
# Deterministic parameter init + driver
# ---------------------------------------------------------------------------
def _init_linear(key, cin, cout):
    kw, kb = jax.random.split(key)
    w = jax.random.normal(kw, (cin, cout), jnp.float32) / jnp.sqrt(float(cin))
    b = 0.01 * jax.random.normal(kb, (1, cout), jnp.float32)
    return w, b


if __name__ == "__main__":
    B, N, K = 2, 16, 8
    Cin = Cout = 32          # input_dim == output_dim (residual add)
    H = 32                   # hidden_dim

    root = jax.random.PRNGKey(0)
    k_feats, k_pts, *k_params = jax.random.split(root, 11)

    layer_dims = {"r": (Cin, H), "p1": (3, H), "p2": (H, H),
                  "q": (H, H), "k": (H, H), "v": (H, H),
                  "a1": (H, H), "a2": (H, H), "e": (H, Cout)}
    params = {}
    for (name, dims), kk in zip(layer_dims.items(), k_params):
        w, b = _init_linear(kk, *dims)
        params["w" + name] = w
        params["b" + name] = b

    feats = jax.random.normal(k_feats, (B, N, Cin), jnp.float32)
    points = jax.random.normal(k_pts, (B, N, 3), jnp.float32)

    out, pts_out = point_transformer_block(feats, points, params, K)
    out = jax.block_until_ready(out)

    ref = reference_block(feats, points, params, K)
    # Tolerance covers the approx-reciprocal softmax (~1e-3 rel) on top of the
    # (precision-matched) bf16 MXU matmuls.
    err = float(jnp.max(jnp.abs(out - ref)))
    assert err < 2e-2, f"max abs error vs reference: {err}"

    print("KERNEL_OK")
</pallas_src>

<mosaic_0001>
module attributes {stable_mosaic.version = 11 : i64} {
  func.func @_linear_kernel(%arg0: i32, %arg1: memref<32x32xbf16, #tpu.memory_space<vmem>>, %arg2: memref<32x32xbf16, #tpu.memory_space<vmem>>, %arg3: memref<1x32xf32, #tpu.memory_space<vmem>>, %arg4: memref<32x32xf32, #tpu.memory_space<vmem>>) attributes {dimension_semantics = [#tpu.dimension_semantics<parallel>], iteration_bounds = array<i64: 1>, scalar_prefetch = 0 : i64, scratch_operands = 0 : i64, tpu.core_type = #tpu.core_type<tc>, window_params = [{transform_indices = @transform_0, window_bounds = array<i64: 32, 32>}, {pipeline_mode = #tpu.pipeline_mode<synchronous>, transform_indices = @transform_1, window_bounds = array<i64: 32, 32>}, {pipeline_mode = #tpu.pipeline_mode<synchronous>, transform_indices = @transform_2, window_bounds = array<i64: 1, 32>}, {transform_indices = @transform_3, window_bounds = array<i64: 32, 32>}]} {
    %c0 = arith.constant 0 : index
    %c0_0 = arith.constant 0 : index
    %0 = vector.load %arg1[%c0, %c0_0] : memref<32x32xbf16, #tpu.memory_space<vmem>>, vector<32x32xbf16>
    %c0_1 = arith.constant 0 : index
    %c0_2 = arith.constant 0 : index
    %1 = vector.load %arg2[%c0_1, %c0_2] : memref<32x32xbf16, #tpu.memory_space<vmem>>, vector<32x32xbf16>
    %cst = arith.constant dense<0.000000e+00> : vector<32x32xf32>
    %2 = tpu.matmul %0, %1, %cst {dimension_numbers = #tpu.dot_dimension_numbers<[1], [0], [0], [1], [0, 0, 1, 1], [], []>} : vector<32x32xbf16>, vector<32x32xbf16>, vector<32x32xf32> -> vector<32x32xf32>
    %c0_3 = arith.constant 0 : index
    %c0_4 = arith.constant 0 : index
    %3 = vector.load %arg3[%c0_3, %c0_4] : memref<1x32xf32, #tpu.memory_space<vmem>>, vector<1x32xf32>
    %4 = vector.broadcast %3 : vector<1x32xf32> to vector<32x32xf32>
    %5 = arith.addf %2, %4 : vector<32x32xf32>
    %c0_5 = arith.constant 0 : index
    %c0_6 = arith.constant 0 : index
    %6 = vector.load %arg4[%c0_5, %c0_6] : memref<32x32xf32, #tpu.memory_space<vmem>>, vector<32x32xf32>
    tpu.vector_store %arg4[%c0_5, %c0_6], %5 {strides = array<i32>} : memref<32x32xf32, #tpu.memory_space<vmem>>, vector<32x32xf32>,
    return
  }
  func.func @transform_0(%arg0: i32) -> (i32, i32) {
    %c0_i32 = arith.constant 0 : i32
    %c0_i32_0 = arith.constant 0 : i32
    return %arg0, %c0_i32 : i32, i32
  }
  func.func @transform_1(%arg0: i32) -> (i32, i32) {
    %c0_i32 = arith.constant 0 : i32
    %c0_i32_0 = arith.constant 0 : i32
    %c0_i32_1 = arith.constant 0 : i32
    return %c0_i32, %c0_i32_0 : i32, i32
  }
  func.func @transform_2(%arg0: i32) -> (i32, i32) {
    %c0_i32 = arith.constant 0 : i32
    %c0_i32_0 = arith.constant 0 : i32
    %c0_i32_1 = arith.constant 0 : i32
    return %c0_i32, %c0_i32_0 : i32, i32
  }
  func.func @transform_3(%arg0: i32) -> (i32, i32) {
    %c0_i32 = arith.constant 0 : i32
    %c0_i32_0 = arith.constant 0 : i32
    return %arg0, %c0_i32 : i32, i32
  }
}

</mosaic_0001>

<llo_original>
// kernel: tpu_custom_call.1
$region0: #{tpu_custom_call.1}
  #allocation0 [shape = 'u32[]', space=smem, size = 0x4, offset = 0x4, fixed_abs, tag = 'smem constant byte address 0x4 - core index']
  #allocation1 [shape = 'u32[144,128]{1,0:T(1,128)}', space=vmem, size = 0x12000, scoped, tag = 'internal scratch']
  %s0 = inlined_call_operand.hbm [shape: bf16[32,32], index: 0, kind: input, shape index: {}]
  %s1 = inlined_call_operand.hbm [shape: bf16[32,32], index: 1, kind: input, shape index: {}]
  %s2 = inlined_call_operand.vmem [shape: f32[1,32], index: 2, kind: input, shape index: {}]
  %s3 = inlined_call_operand.hbm [shape: f32[32,32], index: 3, kind: output, shape index: {}]
  %s4 = sld [smem:[#allocation0]]
  $region30: #{tpu_custom_call.1} parent=0
    _
  %s6 = ssub.s32 1, %s4
  %s7 = scalar_select 0, %s6, %s4
  $region1: #{tpu_custom_call.1} parent=0
    #allocation2 [shape = 'u8[8192]{0}', space=vmem, size = 0x2000, scoped, tag = 'input window, operand 0, single buffered']
    #allocation3 [shape = 's32[1]{0}', space=sflag, size = 0x4, scoped, tag = 'scoped memory for tpu_custom_call.1']
    #allocation4 [shape = 's32[1]{0}', space=sflag, size = 0x4, scoped, tag = 'scoped memory for tpu_custom_call.1']
    #allocation5 [shape = 'u8[8192]{0}', space=vmem, size = 0x2000, scoped, tag = 'input window, operand 1, single buffered']
    #allocation6 [shape = 's32[1]{0}', space=sflag, size = 0x4, scoped, tag = 'scoped memory for tpu_custom_call.1']
    #allocation7 [shape = 'u8[16384]{0}', space=vmem, size = 0x4000, scoped, tag = 'output window, operand 0, single buffered']
    %8 = vsyncpa [#allocation3], 0
    %9 = vsyncpa [#allocation6], 0
    %10 = vsyncpa [#allocation4], 0
    // Predicated region
    $region2: #{tpu_custom_call.1} parent=1 // pred_check
      _
    $region3: #{tpu_custom_call.1} parent=1 // pred_check_branch
      %12 = sbr.rel (0) target = $region5
    $region4: #{tpu_custom_call.1} parent=1 // pred_region
      %s14 = ssub.s32 256, 256
      %15 = vsyncadd [#allocation3], %s14
      %s16 = sshll.u32 [#allocation2], 4
      %s17 = int_to_ptr.vmem [resolvable:$true] %s16
      %22 = dma.hbm_to_vmem [thread:$0]  %s0, 256, %s17, [#allocation3], 64, 64, 4
    $region5: #{tpu_custom_call.1} parent=1 // pred_fallthru
      _
    // Predicated region
    $region6: #{tpu_custom_call.1} parent=1 // pred_check
      _
    $region7: #{tpu_custom_call.1} parent=1 // pred_check_branch
      %24 = sbr.rel (0) target = $region9
    $region8: #{tpu_custom_call.1} parent=1 // pred_region
      %s26 = ssub.s32 256, 256
      %27 = vsyncadd [#allocation6], %s26
      %s28 = sshll.u32 [#allocation5], 4
      %s29 = int_to_ptr.vmem [resolvable:$true] %s28
      %34 = dma.hbm_to_vmem [thread:$0]  %s1, 256, %s29, [#allocation6], 64, 64, 4
    $region9: #{tpu_custom_call.1} parent=1 // pred_fallthru
      _
    // Predicated region
    $region10: #{tpu_custom_call.1} parent=1 // pred_check
      _
    $region11: #{tpu_custom_call.1} parent=1 // pred_check_branch
      %36 = sbr.rel (0) target = $region13
    $region12: #{tpu_custom_call.1} parent=1 // pred_region
      _
    $region13: #{tpu_custom_call.1} parent=1 // pred_fallthru
      _
    // Predicated region
    $region14: #{tpu_custom_call.1} parent=1 // pred_check
      _
    $region15: #{tpu_custom_call.1} parent=1 // pred_check_branch
      %38 = sbr.rel (0) target = $region17
    $region16: #{tpu_custom_call.1} parent=1 // pred_region
      %39 = dma.done [#allocation3], 256
    $region17: #{tpu_custom_call.1} parent=1 // pred_fallthru
      _
    // Predicated region
    $region18: #{tpu_custom_call.1} parent=1 // pred_check
      _
    $region19: #{tpu_custom_call.1} parent=1 // pred_check_branch
      %41 = sbr.rel (0) target = $region21
    $region20: #{tpu_custom_call.1} parent=1 // pred_region
      %42 = dma.done [#allocation6], 256
    $region21: #{tpu_custom_call.1} parent=1 // pred_fallthru
      _
    %v44 = vld [vmem:[#allocation2] sm:$0xf]
    %v45 = vld [vmem:[#allocation2 + $0x4] sm:$0xf]
    %v46 = vld [vmem:[#allocation2 + $0x8] sm:$0xf]
    %v47 = vld [vmem:[#allocation2 + $0xc] sm:$0xf]
    %v48 = vld [vmem:[#allocation5] sm:$0xf]
    %v49 = vld [vmem:[#allocation5 + $0x4] sm:$0xf]
    %v50 = vld [vmem:[#allocation5 + $0x8] sm:$0xf]
    %v51 = vld [vmem:[#allocation5 + $0xc] sm:$0xf]
    %v52 = vld [vmem:[%s2] sm:$0x1]
    %v54 = vlaneseq
    %v55 = vshrl.u32 %v54, 7
    %v56 = vsub.s32 0, %v55
    %v57 = vrot.slane %v52, %v56
    %v63 = vunpack.c.l.b16 %v44
    %v64 = vunpack.c.l.b16 %v45
    %v65 = vunpack.c.l.b16 %v46
    %v66 = vunpack.c.l.b16 %v47
    %v67 = vpack.c.b16 %v64, %v63
    %v68 = vpack.c.b16 %v66, %v65
    %v73 = vunpack.c.l.b16 %v48
    %v74 = vunpack.c.l.b16 %v49
    %v75 = vunpack.c.l.b16 %v50
    %v76 = vunpack.c.l.b16 %v51
    %v77 = vpack.c.b16 %v74, %v73
    %v78 = vpack.c.b16 %v76, %v75
    %vm81 = vcmask 261120
    %v83 = vsel %vm81, %v67, 0
    %v86 = vsel %vm81, %v68, 0
    %88 = vmatprep.subr.bf16.mxu0 0
    %89 = vmatpush1.bf16.msra.mxu0 %v77
    %90 = vmatprep.subr.bf16.mxu0 0
    %91 = vmatpush1.bf16.msra.mxu0 %v78
    %92 = vmatprep.subr.bf16.mxu0 0
    %93 = vmatpush1.bf16.msra.mxu0 0
    %94 = vmatprep.subr.bf16.mxu0 0
    %95 = vmatpush1.bf16.msra.mxu0 0
    %96 = vmatprep.subr.bf16.mxu0 0
    %97 = vmatpush1.bf16.msra.mxu0 0
    %98 = vmatprep.subr.bf16.mxu0 0
    %99 = vmatpush1.bf16.msra.mxu0 0
    %100 = vmatprep.subr.bf16.mxu0 0
    %101 = vmatpush1.bf16.msra.mxu0 0
    %102 = vmatprep.subr.bf16.mxu0 0
    %103 = vmatpush1.bf16.msra.mxu0 0
    %104 = vmatprep.subr.bf16.mxu0 0
    %105 = vmatpush1.bf16.msra.mxu0 0
    %106 = vmatprep.subr.bf16.mxu0 0
    %107 = vmatpush1.bf16.msra.mxu0 0
    %108 = vmatprep.subr.bf16.mxu0 0
    %109 = vmatpush1.bf16.msra.mxu0 0
    %110 = vmatprep.subr.bf16.mxu0 0
    %111 = vmatpush1.bf16.msra.mxu0 0
    %112 = vmatprep.subr.bf16.mxu0 0
    %113 = vmatpush1.bf16.msra.mxu0 0
    %114 = vmatprep.subr.bf16.mxu0 0
    %115 = vmatpush1.bf16.msra.mxu0 0
    %116 = vmatprep.subr.bf16.mxu0 0
    %117 = vmatpush1.bf16.msra.mxu0 0
    %118 = vmatprep.subr.bf16.mxu0 0
    %119 = vmatpush1.bf16.msra.mxu0 0
    %120 = vmatprep.mubr.bf16.mxu0 0
    %121 = vmatmul.mubr.bf16.gmra.mrb[0].mxu0 %v83
    %v122 = vpop.f32.mrb[0].mxu0
    %v123 = vadd.f32 %v57, %v122
    %v124 = vpop.f32.mrb[0].mxu0
    %v125 = vpop.f32.mrb[0].mxu0
    %v126 = vadd.f32 %v57, %v125
    %v127 = vpop.f32.mrb[0].mxu0
    %128 = vmatprep.mubr.bf16.mxu0 0
    %129 = vmatmul.mubr.bf16.gmra.mrb[0].mxu0 %v86
    %v130 = vpop.f32.mrb[0].mxu0
    %v131 = vadd.f32 %v57, %v130
    %v132 = vpop.f32.mrb[0].mxu0
    %v133 = vpop.f32.mrb[0].mxu0
    %v134 = vadd.f32 %v57, %v133
    %v135 = vpop.f32.mrb[0].mxu0
    %136 = vdwg.mxu0
    %137 = vst.msk [vmem:[#allocation7] sm:$0xff] %vm81, %v123
    %138 = vst.msk [vmem:[#allocation7 + $0x8] sm:$0xff] %vm81, %v126
    %139 = vst.msk [vmem:[#allocation7 + $0x10] sm:$0xff] %vm81, %v131
    %140 = vst.msk [vmem:[#allocation7 + $0x18] sm:$0xff] %vm81, %v134
    // Predicated region
    $region22: #{tpu_custom_call.1} parent=1 // pred_check
      _
    $region23: #{tpu_custom_call.1} parent=1 // pred_check_branch
      %142 = sbr.rel (0) target = $region25
    $region24: #{tpu_custom_call.1} parent=1 // pred_region
      %s144 = ssub.s32 512, 512
      %145 = vsyncadd [#allocation4], %s144
      %s146 = sshll.u32 [#allocation7], 4
      %s147 = int_to_ptr.vmem [resolvable:$true] %s146
      %152 = dma.vmem_to_hbm [thread:$0]  %s147, 512, %s3, [#allocation4], 128, 128, 8
    $region25: #{tpu_custom_call.1} parent=1 // pred_fallthru
      _
    // Predicated region
    $region26: #{tpu_custom_call.1} parent=1 // pred_check
      _
    $region27: #{tpu_custom_call.1} parent=1 // pred_check_branch
      %154 = sbr.rel (0) target = $region29
    $region28: #{tpu_custom_call.1} parent=1 // pred_region
      %155 = dma.done [#allocation4], 512
    $region29: #{tpu_custom_call.1} parent=1 // pred_fallthru
      _
    %156 = vsyncpa [#allocation3], 1
    %157 = vsyncpa [#allocation6], 1
    %158 = vsyncpa [#allocation4], 1

</llo_original>
